<compile_context>
chip_gen: v7x
topology: tpu7x:2x2x1
jax: 0.10.0
libtpu: 0.0.40
codegen_flags: <defaults>
</compile_context>

<pallas_src>
import functools
from typing import NamedTuple

import jax
import jax.numpy as jnp
from jax.experimental import pallas as pl
from jax.experimental.pallas import tpu as pltpu


HP = 128  # padded hidden lane width (hidden=64 -> one 128-lane MXU tile)


def _round_up(n, m):
    return (n + m - 1) // m * m


def _pad2(a, rows, cols):
    """Zero-pad a 2-D array up to (rows, cols)."""
    return jnp.pad(a, ((0, rows - a.shape[0]), (0, cols - a.shape[1])))


# ----------------------------------------------------------------------------
# Kernel
# ----------------------------------------------------------------------------
def qnet_kernel(x_ref, w_ref, b_ref, o_ref, *, sd_p, hp, action_dim, fuse_argmax):
    """Fused relu(x@W1+b1) -> relu(@W2+b2) -> @W3+b3 on one batch tile.

    w_ref packs [W2 | W3 | W1] along rows (the two 128-row slices first so
    every slice start stays aligned for any dtype packing); b_ref packs
    [b1; b2; b3] as f32 rows.  x arrives as f32 and is cast to the weight
    dtype in-register; accumulation and the bias/ReLU epilogue are f32.
    """
    wdt = w_ref.dtype
    w2 = w_ref[0:hp, :]
    w3 = w_ref[hp:2 * hp, :]
    w1 = w_ref[2 * hp:2 * hp + sd_p, :]
    b1 = b_ref[0:1, :]
    b2 = b_ref[1:2, :]
    b3 = b_ref[2:3, :]

    x = x_ref[...].astype(wdt)  # f32 HBM read, cast in-register (no wrapper pass)
    h1 = jnp.dot(x, w1, preferred_element_type=jnp.float32) + b1
    h1 = jnp.maximum(h1, 0.0).astype(wdt)
    h2 = jnp.dot(h1, w2, preferred_element_type=jnp.float32) + b2
    h2 = jnp.maximum(h2, 0.0).astype(wdt)
    q = jnp.dot(h2, w3, preferred_element_type=jnp.float32) + b3  # (tb, HP) f32

    if fuse_argmax:
        # Greedy-action epilogue: mask zero-padded action lanes to -inf, then
        # take the first index attaining the max (torch.argmax tie-breaking).
        col = jax.lax.broadcasted_iota(jnp.int32, q.shape, 1)
        qm = jnp.where(col < action_dim, q, -jnp.inf)
        m = jnp.max(qm, axis=-1, keepdims=True)
        idx = jnp.min(jnp.where(qm == m, col, q.shape[-1]), axis=-1, keepdims=True)
        o_ref[...] = idx.astype(jnp.int32)
    else:
        # Store only the live action columns (narrow output, no padded slab).
        o_ref[...] = q[:, :action_dim].astype(o_ref.dtype)


# ----------------------------------------------------------------------------
# Parameter packing (hoisted off the per-call path — do this once per params)
# ----------------------------------------------------------------------------
class PackedQNet(NamedTuple):
    w: jax.Array       # (2*HP + sd_p, HP), compute dtype
    b: jax.Array       # (3, HP), f32
    state_dim: int
    action_dim: int
    sd_p: int


def pack_params(params, compute_dtype=jnp.bfloat16):
    """Pack the 6 Linear tensors into 2 VMEM-resident buffers (done once)."""
    w1, b1 = params["w1"], params["b1"]
    w2, b2 = params["w2"], params["b2"]
    w3, b3 = params["w3"], params["b3"]
    state_dim, hidden = w1.shape
    action_dim = w3.shape[1]
    assert hidden <= HP and action_dim <= HP

    # Round the w1 row count to the compute dtype's sublane packing
    # (8 rows/vreg for f32, 16 for bf16, 32 for 8-bit types).
    sub = 8 * (4 // jnp.dtype(compute_dtype).itemsize)
    sd_p = _round_up(state_dim, sub)

    w_packed = jnp.concatenate(
        [_pad2(w2, HP, HP), _pad2(w3, HP, HP), _pad2(w1, sd_p, HP)], axis=0
    ).astype(compute_dtype)
    b_packed = jnp.concatenate(
        [_pad2(b1.reshape(1, -1), 1, HP),
         _pad2(b2.reshape(1, -1), 1, HP),
         _pad2(b3.reshape(1, -1), 1, HP)], axis=0
    ).astype(jnp.float32)
    return PackedQNet(w_packed, b_packed, state_dim, action_dim, sd_p)


# ----------------------------------------------------------------------------
# Forward
# ----------------------------------------------------------------------------
def _choose_tb(batch, tb_max):
    """Batch tile: minimal single tile for tiny batches; otherwise split so the
    grid has >= 2 tiles (shards across v7x's two TensorCores), capped at tb_max
    to keep DMAs long and per-step overhead amortized."""
    b8 = _round_up(batch, 8)
    if b8 <= 256:
        return b8
    return max(128, min(tb_max, _round_up(pl.cdiv(b8, 2), 8)))


def _qnet_call(x, packed, *, tb_max, fuse_argmax):
    B, state_dim = x.shape
    assert state_dim == packed.state_dim
    sd_p, action_dim = packed.sd_p, packed.action_dim

    tb = _choose_tb(B, tb_max)
    b_pad = _round_up(B, tb)

    # Keep x f32 (cast happens inside the kernel); pad only when needed.
    x_p = x if x.dtype == jnp.float32 else x.astype(jnp.float32)
    if b_pad != B or sd_p != state_dim:
        x_p = jnp.pad(x_p, ((0, b_pad - B), (0, sd_p - state_dim)))

    out_cols = 1 if fuse_argmax else action_dim
    out_dtype = jnp.int32 if fuse_argmax else jnp.float32

    kernel = functools.partial(
        qnet_kernel, sd_p=sd_p, hp=HP, action_dim=action_dim,
        fuse_argmax=fuse_argmax)

    out = pl.pallas_call(
        kernel,
        out_shape=jax.ShapeDtypeStruct((b_pad, out_cols), out_dtype),
        grid=(b_pad // tb,),
        in_specs=[
            pl.BlockSpec((tb, sd_p), lambda i: (i, 0)),      # streamed f32 x tile
            pl.BlockSpec(packed.w.shape, lambda i: (0, 0)),  # VMEM-resident weights
            pl.BlockSpec(packed.b.shape, lambda i: (0, 0)),  # VMEM-resident biases
        ],
        out_specs=pl.BlockSpec((tb, out_cols), lambda i: (i, 0)),
        compiler_params=pltpu.CompilerParams(
            dimension_semantics=("parallel",),  # shard batch tiles across TCs (v7x)
        ),
    )(x_p, packed.w, packed.b)

    return out[:B] if b_pad != B else out


def qnetwork_forward(x, packed, *, tb_max=1024):
    """Q-values, shape (B, action_dim) f32 — matches QNetwork.forward."""
    return _qnet_call(x, packed, tb_max=tb_max, fuse_argmax=False)


def qnetwork_greedy_action(x, packed, *, tb_max=1024):
    """argmax_a Q(s, a), shape (B,) int32 — fused epilogue for action selection."""
    return _qnet_call(x, packed, tb_max=tb_max, fuse_argmax=True)[:, 0]


# ----------------------------------------------------------------------------
# Reference / init / demo
# ----------------------------------------------------------------------------
def init_params(key, state_dim, action_dim, hidden=64):
    """Deterministic synthetic init (PyTorch-like uniform fan-in scaling)."""
    ks = jax.random.split(key, 6)

    def lin(kw, kb, fan_in, fan_out):
        bound = 1.0 / jnp.sqrt(fan_in)
        w = jax.random.uniform(kw, (fan_in, fan_out), jnp.float32, -bound, bound)
        b = jax.random.uniform(kb, (1, fan_out), jnp.float32, -bound, bound)
        return w, b

    w1, b1 = lin(ks[0], ks[1], state_dim, hidden)
    w2, b2 = lin(ks[2], ks[3], hidden, hidden)
    w3, b3 = lin(ks[4], ks[5], hidden, action_dim)
    return {"w1": w1, "b1": b1, "w2": w2, "b2": b2, "w3": w3, "b3": b3}


def qnetwork_ref(x, p):
    h1 = jnp.maximum(x @ p["w1"] + p["b1"], 0.0)
    h2 = jnp.maximum(h1 @ p["w2"] + p["b2"], 0.0)
    return h2 @ p["w3"] + p["b3"]


if __name__ == "__main__":
    key = jax.random.PRNGKey(0)
    k_x, k_p, k_x2 = jax.random.split(key, 3)

    state_dim, action_dim = 8, 4
    params = init_params(k_p, state_dim, action_dim)

    # Pack once (off the per-call path), for both compute dtypes.
    packed_f32 = pack_params(params, compute_dtype=jnp.float32)
    packed_bf16 = pack_params(params, compute_dtype=jnp.bfloat16)

    x_small = jax.random.normal(k_x, (2, state_dim), jnp.float32)     # latency path
    x_big = jax.random.normal(k_x2, (300, state_dim), jnp.float32)    # multi-tile + row padding

    for x in (x_small, x_big):
        ref = qnetwork_ref(x, params)

        # f32 compute path (close match to the pure-XLA reference; MXU f32 is
        # not guaranteed bit-exact, tolerances below pass at these dims).
        out_f32 = jax.block_until_ready(qnetwork_forward(x, packed_f32))
        assert out_f32.shape == (x.shape[0], action_dim)
        assert jnp.allclose(out_f32, ref, atol=1e-5, rtol=1e-5), "f32 mismatch vs reference"

        # bf16 weights / f32 accumulation path (expected ~1e-2 relative error).
        out_bf16 = jax.block_until_ready(qnetwork_forward(x, packed_bf16))
        assert out_bf16.shape == (x.shape[0], action_dim)
        assert jnp.allclose(out_bf16, ref, atol=5e-2, rtol=5e-2), "bf16 mismatch vs reference"

        # Fused greedy-action epilogue must agree with argmax of the kernel's
        # own Q-values (identical math -> identical tie-breaking).
        act = jax.block_until_ready(qnetwork_greedy_action(x, packed_bf16))
        assert act.shape == (x.shape[0],)
        assert jnp.array_equal(act, jnp.argmax(out_bf16, axis=-1).astype(jnp.int32)), \
            "fused argmax mismatch vs Q-value argmax"

    print("KERNEL_OK")
</pallas_src>

<mosaic_0001>
module attributes {stable_mosaic.version = 11 : i64} {
  func.func @qnet_kernel(%arg0: i32, %arg1: memref<8x8xf32, #tpu.memory_space<vmem>>, %arg2: memref<264x128xf32, #tpu.memory_space<vmem>>, %arg3: memref<3x128xf32, #tpu.memory_space<vmem>>, %arg4: memref<8x4xf32, #tpu.memory_space<vmem>>) attributes {dimension_semantics = [#tpu.dimension_semantics<parallel>], iteration_bounds = array<i64: 1>, scalar_prefetch = 0 : i64, scratch_operands = 0 : i64, tpu.core_type = #tpu.core_type<tc>, window_params = [{transform_indices = @transform_0, window_bounds = array<i64: 8, 8>}, {pipeline_mode = #tpu.pipeline_mode<synchronous>, transform_indices = @transform_1, window_bounds = array<i64: 264, 128>}, {pipeline_mode = #tpu.pipeline_mode<synchronous>, transform_indices = @transform_2, window_bounds = array<i64: 3, 128>}, {transform_indices = @transform_3, window_bounds = array<i64: 8, 4>}]} {
    %c0 = arith.constant 0 : index
    %c0_0 = arith.constant 0 : index
    %0 = vector.load %arg2[%c0, %c0_0] : memref<264x128xf32, #tpu.memory_space<vmem>>, vector<128x128xf32>
    %c128 = arith.constant 128 : index
    %c0_1 = arith.constant 0 : index
    %1 = vector.load %arg2[%c128, %c0_1] : memref<264x128xf32, #tpu.memory_space<vmem>>, vector<128x128xf32>
    %c256 = arith.constant 256 : index
    %c0_2 = arith.constant 0 : index
    %2 = vector.load %arg2[%c256, %c0_2] : memref<264x128xf32, #tpu.memory_space<vmem>>, vector<8x128xf32>
    %c0_3 = arith.constant 0 : index
    %c0_4 = arith.constant 0 : index
    %3 = vector.load %arg3[%c0_3, %c0_4] : memref<3x128xf32, #tpu.memory_space<vmem>>, vector<1x128xf32>
    %c1 = arith.constant 1 : index
    %c0_5 = arith.constant 0 : index
    %4 = vector.load %arg3[%c1, %c0_5] : memref<3x128xf32, #tpu.memory_space<vmem>>, vector<1x128xf32>
    %c2 = arith.constant 2 : index
    %c0_6 = arith.constant 0 : index
    %5 = vector.load %arg3[%c2, %c0_6] : memref<3x128xf32, #tpu.memory_space<vmem>>, vector<1x128xf32>
    %c0_7 = arith.constant 0 : index
    %c0_8 = arith.constant 0 : index
    %6 = vector.load %arg1[%c0_7, %c0_8] : memref<8x8xf32, #tpu.memory_space<vmem>>, vector<8x8xf32>
    %cst = arith.constant dense<0.000000e+00> : vector<8x128xf32>
    %7 = tpu.matmul %6, %2, %cst {dimension_numbers = #tpu.dot_dimension_numbers<[1], [0], [0], [1], [0, 0, 1, 1], [], []>} : vector<8x8xf32>, vector<8x128xf32>, vector<8x128xf32> -> vector<8x128xf32>
    %8 = vector.broadcast %3 : vector<1x128xf32> to vector<8x128xf32>
    %9 = arith.addf %7, %8 : vector<8x128xf32>
    %cst_9 = arith.constant 0.000000e+00 : f32
    %10 = vector.broadcast %cst_9 : f32 to vector<8x128xf32>
    %11 = arith.maximumf %9, %10 : vector<8x128xf32>
    %cst_10 = arith.constant dense<0.000000e+00> : vector<8x128xf32>
    %12 = tpu.matmul %11, %0, %cst_10 {dimension_numbers = #tpu.dot_dimension_numbers<[1], [0], [0], [1], [0, 0, 1, 1], [], []>} : vector<8x128xf32>, vector<128x128xf32>, vector<8x128xf32> -> vector<8x128xf32>
    %13 = vector.broadcast %4 : vector<1x128xf32> to vector<8x128xf32>
    %14 = arith.addf %12, %13 : vector<8x128xf32>
    %cst_11 = arith.constant 0.000000e+00 : f32
    %15 = vector.broadcast %cst_11 : f32 to vector<8x128xf32>
    %16 = arith.maximumf %14, %15 : vector<8x128xf32>
    %cst_12 = arith.constant dense<0.000000e+00> : vector<8x128xf32>
    %17 = tpu.matmul %16, %1, %cst_12 {dimension_numbers = #tpu.dot_dimension_numbers<[1], [0], [0], [1], [0, 0, 1, 1], [], []>} : vector<8x128xf32>, vector<128x128xf32>, vector<8x128xf32> -> vector<8x128xf32>
    %18 = vector.broadcast %5 : vector<1x128xf32> to vector<8x128xf32>
    %19 = arith.addf %17, %18 : vector<8x128xf32>
    %20 = vector.extract_strided_slice %19 {offsets = [0, 0], sizes = [8, 4], strides = [1, 1]} : vector<8x128xf32> to vector<8x4xf32>
    %c0_13 = arith.constant 0 : index
    %c0_14 = arith.constant 0 : index
    %21 = vector.load %arg4[%c0_13, %c0_14] : memref<8x4xf32, #tpu.memory_space<vmem>>, vector<8x4xf32>
    tpu.vector_store %arg4[%c0_13, %c0_14], %20 {strides = array<i32>} : memref<8x4xf32, #tpu.memory_space<vmem>>, vector<8x4xf32>,
    return
  }
  func.func @transform_0(%arg0: i32) -> (i32, i32) {
    %c0_i32 = arith.constant 0 : i32
    %c0_i32_0 = arith.constant 0 : i32
    return %arg0, %c0_i32 : i32, i32
  }
  func.func @transform_1(%arg0: i32) -> (i32, i32) {
    %c0_i32 = arith.constant 0 : i32
    %c0_i32_0 = arith.constant 0 : i32
    %c0_i32_1 = arith.constant 0 : i32
    return %c0_i32, %c0_i32_0 : i32, i32
  }
  func.func @transform_2(%arg0: i32) -> (i32, i32) {
    %c0_i32 = arith.constant 0 : i32
    %c0_i32_0 = arith.constant 0 : i32
    %c0_i32_1 = arith.constant 0 : i32
    return %c0_i32, %c0_i32_0 : i32, i32
  }
  func.func @transform_3(%arg0: i32) -> (i32, i32) {
    %c0_i32 = arith.constant 0 : i32
    %c0_i32_0 = arith.constant 0 : i32
    return %arg0, %c0_i32 : i32, i32
  }
}

</mosaic_0001>

<llo_original>
// kernel: tpu_custom_call.1
$region0: #{tpu_custom_call.1}
  #allocation0 [shape = 'u32[]', space=smem, size = 0x4, offset = 0x4, fixed_abs, tag = 'smem constant byte address 0x4 - core index']
  #allocation1 [shape = 'u32[144,128]{1,0:T(1,128)}', space=vmem, size = 0x12000, scoped, tag = 'internal scratch']
  %s0 = inlined_call_operand.hbm [shape: f32[8,8], index: 0, kind: input, shape index: {}]
  %s1 = inlined_call_operand.hbm [shape: f32[264,128], index: 1, kind: input, shape index: {}]
  %s2 = inlined_call_operand.vmem [shape: f32[3,128], index: 2, kind: input, shape index: {}]
  %s3 = inlined_call_operand.vmem [shape: f32[8,4], index: 3, kind: output, shape index: {}]
  %s4 = sld [smem:[#allocation0]]
  $region30: #{tpu_custom_call.1} parent=0
    _
  %s6 = ssub.s32 1, %s4
  %s7 = scalar_select 0, %s6, %s4
  $region1: #{tpu_custom_call.1} parent=0
    #allocation2 [shape = 'u8[4096]{0}', space=vmem, size = 0x1000, scoped, tag = 'input window, operand 0, single buffered']
    #allocation3 [shape = 's32[1]{0}', space=sflag, size = 0x4, scoped, tag = 'scoped memory for tpu_custom_call.1']
    #allocation4 [shape = 'u8[135168]{0}', space=vmem, size = 0x21000, scoped, tag = 'input window, operand 1, single buffered']
    #allocation5 [shape = 's32[1]{0}', space=sflag, size = 0x4, scoped, tag = 'scoped memory for tpu_custom_call.1']
    %8 = vsyncpa [#allocation3], 0
    %9 = vsyncpa [#allocation5], 0
    // Predicated region
    $region2: #{tpu_custom_call.1} parent=1 // pred_check
      _
    $region3: #{tpu_custom_call.1} parent=1 // pred_check_branch
      %11 = sbr.rel (0) target = $region5
    $region4: #{tpu_custom_call.1} parent=1 // pred_region
      %s13 = ssub.s32 128, 128
      %14 = vsyncadd [#allocation3], %s13
      %s16 = sshll.u32 [#allocation2], 4
      %s17 = int_to_ptr.vmem [resolvable:$true] %s16
      %19 = dma.hbm_to_vmem [thread:$0]  %s0, 128, %s17, [#allocation3]
    $region5: #{tpu_custom_call.1} parent=1 // pred_fallthru
      _
    // Predicated region
    $region6: #{tpu_custom_call.1} parent=1 // pred_check
      _
    $region7: #{tpu_custom_call.1} parent=1 // pred_check_branch
      %21 = sbr.rel (0) target = $region9
    $region8: #{tpu_custom_call.1} parent=1 // pred_region
      %s23 = ssub.s32 4224, 4224
      %24 = vsyncadd [#allocation5], %s23
      %s25 = sshll.u32 [#allocation4], 4
      %s26 = int_to_ptr.vmem [resolvable:$true] %s25
      %31 = dma.hbm_to_vmem [thread:$0]  %s1, 4224, %s26, [#allocation5], 128, 128, 8
    $region9: #{tpu_custom_call.1} parent=1 // pred_fallthru
      _
    // Predicated region
    $region10: #{tpu_custom_call.1} parent=1 // pred_check
      _
    $region11: #{tpu_custom_call.1} parent=1 // pred_check_branch
      %33 = sbr.rel (0) target = $region13
    $region12: #{tpu_custom_call.1} parent=1 // pred_region
      _
    $region13: #{tpu_custom_call.1} parent=1 // pred_fallthru
      _
    // Predicated region
    $region14: #{tpu_custom_call.1} parent=1 // pred_check
      _
    $region15: #{tpu_custom_call.1} parent=1 // pred_check_branch
      %35 = sbr.rel (0) target = $region17
    $region16: #{tpu_custom_call.1} parent=1 // pred_region
      %36 = dma.done [#allocation3], 128
    $region17: #{tpu_custom_call.1} parent=1 // pred_fallthru
      _
    // Predicated region
    $region18: #{tpu_custom_call.1} parent=1 // pred_check
      _
    $region19: #{tpu_custom_call.1} parent=1 // pred_check_branch
      %38 = sbr.rel (0) target = $region21
    $region20: #{tpu_custom_call.1} parent=1 // pred_region
      %39 = dma.done [#allocation5], 4224
    $region21: #{tpu_custom_call.1} parent=1 // pred_fallthru
      _
    %v40 = vld [vmem:[#allocation4] sm:$0xff]
    %v41 = vld [vmem:[#allocation4 + $0x8] sm:$0xff]
    %v42 = vld [vmem:[#allocation4 + $0x10] sm:$0xff]
    %v43 = vld [vmem:[#allocation4 + $0x18] sm:$0xff]
    %v44 = vld [vmem:[#allocation4 + $0x20] sm:$0xff]
    %v45 = vld [vmem:[#allocation4 + $0x28] sm:$0xff]
    %v46 = vld [vmem:[#allocation4 + $0x30] sm:$0xff]
    %v47 = vld [vmem:[#allocation4 + $0x38] sm:$0xff]
    %v48 = vld [vmem:[#allocation4 + $0x40] sm:$0xff]
    %v49 = vld [vmem:[#allocation4 + $0x48] sm:$0xff]
    %v50 = vld [vmem:[#allocation4 + $0x50] sm:$0xff]
    %v51 = vld [vmem:[#allocation4 + $0x58] sm:$0xff]
    %v52 = vld [vmem:[#allocation4 + $0x60] sm:$0xff]
    %v53 = vld [vmem:[#allocation4 + $0x68] sm:$0xff]
    %v54 = vld [vmem:[#allocation4 + $0x70] sm:$0xff]
    %v55 = vld [vmem:[#allocation4 + $0x78] sm:$0xff]
    %v56 = vld [vmem:[#allocation4 + $0x80] sm:$0xff]
    %v57 = vld [vmem:[#allocation4 + $0x88] sm:$0xff]
    %v58 = vld [vmem:[#allocation4 + $0x90] sm:$0xff]
    %v59 = vld [vmem:[#allocation4 + $0x98] sm:$0xff]
    %v60 = vld [vmem:[#allocation4 + $0xa0] sm:$0xff]
    %v61 = vld [vmem:[#allocation4 + $0xa8] sm:$0xff]
    %v62 = vld [vmem:[#allocation4 + $0xb0] sm:$0xff]
    %v63 = vld [vmem:[#allocation4 + $0xb8] sm:$0xff]
    %v64 = vld [vmem:[#allocation4 + $0xc0] sm:$0xff]
    %v65 = vld [vmem:[#allocation4 + $0xc8] sm:$0xff]
    %v66 = vld [vmem:[#allocation4 + $0xd0] sm:$0xff]
    %v67 = vld [vmem:[#allocation4 + $0xd8] sm:$0xff]
    %v68 = vld [vmem:[#allocation4 + $0xe0] sm:$0xff]
    %v69 = vld [vmem:[#allocation4 + $0xe8] sm:$0xff]
    %v70 = vld [vmem:[#allocation4 + $0xf0] sm:$0xff]
    %v71 = vld [vmem:[#allocation4 + $0xf8] sm:$0xff]
    %v72 = vld [vmem:[#allocation4 + $0x100] sm:$0xff]
    %v73 = vld [vmem:[%s2] sm:$0x1]
    %v74 = vld [vmem:[%s2 + $0x1] sm:$0x1]
    %v75 = vld [vmem:[%s2 + $0x2] sm:$0x1]
    %v76 = vld [vmem:[#allocation2] sm:$0xff]
    %v77 = vlaneseq
    %v78 = vshrl.u32 %v77, 7
    %v79 = vsub.s32 0, %v78
    %v80 = vrot.slane %v73, %v79
    %vm81 = vcmask 64512
    %v83 = vsel %vm81, %v76, 0
    %85 = vmatprep.subr.mxu0 0.0
    %86 = vmatpush1.msra.mxu0 %v72
    %87 = vmatprep.subr.mxu0 0.0
    %88 = vmatpush1.msra.mxu0 0.0
    %89 = vmatprep.subr.mxu0 0.0
    %90 = vmatpush1.msra.mxu0 0.0
    %91 = vmatprep.subr.mxu0 0.0
    %92 = vmatpush1.msra.mxu0 0.0
    %93 = vmatprep.subr.mxu0 0.0
    %94 = vmatpush1.msra.mxu0 0.0
    %95 = vmatprep.subr.mxu0 0.0
    %96 = vmatpush1.msra.mxu0 0.0
    %97 = vmatprep.subr.mxu0 0.0
    %98 = vmatpush1.msra.mxu0 0.0
    %99 = vmatprep.subr.mxu0 0.0
    %100 = vmatpush1.msra.mxu0 0.0
    %101 = vmatprep.subr.mxu0 0.0
    %102 = vmatpush1.msra.mxu0 0.0
    %103 = vmatprep.subr.mxu0 0.0
    %104 = vmatpush1.msra.mxu0 0.0
    %105 = vmatprep.subr.mxu0 0.0
    %106 = vmatpush1.msra.mxu0 0.0
    %107 = vmatprep.subr.mxu0 0.0
    %108 = vmatpush1.msra.mxu0 0.0
    %109 = vmatprep.subr.mxu0 0.0
    %110 = vmatpush1.msra.mxu0 0.0
    %111 = vmatprep.subr.mxu0 0.0
    %112 = vmatpush1.msra.mxu0 0.0
    %113 = vmatprep.subr.mxu0 0.0
    %114 = vmatpush1.msra.mxu0 0.0
    %115 = vmatprep.subr.mxu0 0.0
    %116 = vmatpush1.msra.mxu0 0.0
    %117 = vmatprep.subr.mxu0 0.0
    %118 = vmatpush1.msra.mxu0 0.0
    %119 = vmatprep.subr.mxu0 0.0
    %120 = vmatpush1.msra.mxu0 0.0
    %121 = vmatprep.subr.mxu0 0.0
    %122 = vmatpush1.msra.mxu0 0.0
    %123 = vmatprep.subr.mxu0 0.0
    %124 = vmatpush1.msra.mxu0 0.0
    %125 = vmatprep.subr.mxu0 0.0
    %126 = vmatpush1.msra.mxu0 0.0
    %127 = vmatprep.subr.mxu0 0.0
    %128 = vmatpush1.msra.mxu0 0.0
    %129 = vmatprep.subr.mxu0 0.0
    %130 = vmatpush1.msra.mxu0 0.0
    %131 = vmatprep.subr.mxu0 0.0
    %132 = vmatpush1.msra.mxu0 0.0
    %133 = vmatprep.subr.mxu0 0.0
    %134 = vmatpush1.msra.mxu0 0.0
    %135 = vmatprep.subr.mxu0 0.0
    %136 = vmatpush1.msra.mxu0 0.0
    %137 = vmatprep.subr.mxu0 0.0
    %138 = vmatpush1.msra.mxu0 0.0
    %139 = vmatprep.subr.mxu0 0.0
    %140 = vmatpush1.msra.mxu0 0.0
    %141 = vmatprep.subr.mxu0 0.0
    %142 = vmatpush1.msra.mxu0 0.0
    %143 = vmatprep.subr.mxu0 0.0
    %144 = vmatpush1.msra.mxu0 0.0
    %145 = vmatprep.subr.mxu0 0.0
    %146 = vmatpush1.msra.mxu0 0.0
    %147 = vmatprep.subr.mxu0 0.0
    %148 = vmatpush1.msra.mxu0 0.0
    %149 = vmatprep.mubr.f32.mxu0 0.0
    %150 = vmatmul.mubr.f32.gmra.mrb[0].mxu0 %v83
    %v151 = vpop.f32.mrb[0].mxu0
    %v152 = vadd.f32 %v80, %v151
    %v153 = vpop.f32.mrb[0].mxu0
    %154 = vdwg.mxu0
    %v155 = vmax.f32 %v152, 0.0
    %v156 = vlaneseq
    %v157 = vshrl.u32 %v156, 7
    %v158 = vsub.s32 0, %v157
    %v159 = vrot.slane %v74, %v158
    %160 = vmatprep.subr.mxu0 0.0
    %161 = vmatpush1.msra.mxu0 %v40
    %162 = vmatprep.subr.mxu0 0.0
    %163 = vmatpush1.msra.mxu0 %v41
    %164 = vmatprep.subr.mxu0 0.0
    %165 = vmatpush1.msra.mxu0 %v42
    %166 = vmatprep.subr.mxu0 0.0
    %167 = vmatpush1.msra.mxu0 %v43
    %168 = vmatprep.subr.mxu0 0.0
    %169 = vmatpush1.msra.mxu0 %v44
    %170 = vmatprep.subr.mxu0 0.0
    %171 = vmatpush1.msra.mxu0 %v45
    %172 = vmatprep.subr.mxu0 0.0
    %173 = vmatpush1.msra.mxu0 %v46
    %174 = vmatprep.subr.mxu0 0.0
    %175 = vmatpush1.msra.mxu0 %v47
    %176 = vmatprep.subr.mxu0 0.0
    %177 = vmatpush1.msra.mxu0 %v48
    %178 = vmatprep.subr.mxu0 0.0
    %179 = vmatpush1.msra.mxu0 %v49
    %180 = vmatprep.subr.mxu0 0.0
    %181 = vmatpush1.msra.mxu0 %v50
    %182 = vmatprep.subr.mxu0 0.0
    %183 = vmatpush1.msra.mxu0 %v51
    %184 = vmatprep.subr.mxu0 0.0
    %185 = vmatpush1.msra.mxu0 %v52
    %186 = vmatprep.subr.mxu0 0.0
    %187 = vmatpush1.msra.mxu0 %v53
    %188 = vmatprep.subr.mxu0 0.0
    %189 = vmatpush1.msra.mxu0 %v54
    %190 = vmatprep.subr.mxu0 0.0
    %191 = vmatpush1.msra.mxu0 %v55
    %192 = vmatprep.subr.mxu0 0.0
    %193 = vmatpush1.msra.mxu0 0.0
    %194 = vmatprep.subr.mxu0 0.0
    %195 = vmatpush1.msra.mxu0 0.0
    %196 = vmatprep.subr.mxu0 0.0
    %197 = vmatpush1.msra.mxu0 0.0
    %198 = vmatprep.subr.mxu0 0.0
    %199 = vmatpush1.msra.mxu0 0.0
    %200 = vmatprep.subr.mxu0 0.0
    %201 = vmatpush1.msra.mxu0 0.0
    %202 = vmatprep.subr.mxu0 0.0
    %203 = vmatpush1.msra.mxu0 0.0
    %204 = vmatprep.subr.mxu0 0.0
    %205 = vmatpush1.msra.mxu0 0.0
    %206 = vmatprep.subr.mxu0 0.0
    %207 = vmatpush1.msra.mxu0 0.0
    %208 = vmatprep.subr.mxu0 0.0
    %209 = vmatpush1.msra.mxu0 0.0
    %210 = vmatprep.subr.mxu0 0.0
    %211 = vmatpush1.msra.mxu0 0.0
    %212 = vmatprep.subr.mxu0 0.0
    %213 = vmatpush1.msra.mxu0 0.0
    %214 = vmatprep.subr.mxu0 0.0
    %215 = vmatpush1.msra.mxu0 0.0
    %216 = vmatprep.subr.mxu0 0.0
    %217 = vmatpush1.msra.mxu0 0.0
    %218 = vmatprep.subr.mxu0 0.0
    %219 = vmatpush1.msra.mxu0 0.0
    %220 = vmatprep.subr.mxu0 0.0
    %221 = vmatpush1.msra.mxu0 0.0
    %222 = vmatprep.subr.mxu0 0.0
    %223 = vmatpush1.msra.mxu0 0.0
    %224 = vmatprep.mubr.f32.mxu0 0.0
    %225 = vmatmul.mubr.f32.gmra.mrb[0].mxu0 %v155
    %v226 = vpop.f32.mrb[0].mxu0
    %v227 = vadd.f32 %v159, %v226
    %v228 = vpop.f32.mrb[0].mxu0
    %229 = vdwg.mxu0
    %v230 = vmax.f32 %v227, 0.0
    %v231 = vlaneseq
    %v232 = vshrl.u32 %v231, 7
    %v233 = vsub.s32 0, %v232
    %v234 = vrot.slane %v75, %v233
    %235 = vmatprep.subr.mxu0 0.0
    %236 = vmatpush1.msra.mxu0 %v56
    %237 = vmatprep.subr.mxu0 0.0
    %238 = vmatpush1.msra.mxu0 %v57
    %239 = vmatprep.subr.mxu0 0.0
    %240 = vmatpush1.msra.mxu0 %v58
    %241 = vmatprep.subr.mxu0 0.0
    %242 = vmatpush1.msra.mxu0 %v59
    %243 = vmatprep.subr.mxu0 0.0
    %244 = vmatpush1.msra.mxu0 %v60
    %245 = vmatprep.subr.mxu0 0.0
    %246 = vmatpush1.msra.mxu0 %v61
    %247 = vmatprep.subr.mxu0 0.0
    %248 = vmatpush1.msra.mxu0 %v62
    %249 = vmatprep.subr.mxu0 0.0
    %250 = vmatpush1.msra.mxu0 %v63
    %251 = vmatprep.subr.mxu0 0.0
    %252 = vmatpush1.msra.mxu0 %v64
    %253 = vmatprep.subr.mxu0 0.0
    %254 = vmatpush1.msra.mxu0 %v65
    %255 = vmatprep.subr.mxu0 0.0
    %256 = vmatpush1.msra.mxu0 %v66
    %257 = vmatprep.subr.mxu0 0.0
    %258 = vmatpush1.msra.mxu0 %v67
    %259 = vmatprep.subr.mxu0 0.0
    %260 = vmatpush1.msra.mxu0 %v68
    %261 = vmatprep.subr.mxu0 0.0
    %262 = vmatpush1.msra.mxu0 %v69
    %263 = vmatprep.subr.mxu0 0.0
    %264 = vmatpush1.msra.mxu0 %v70
    %265 = vmatprep.subr.mxu0 0.0
    %266 = vmatpush1.msra.mxu0 %v71
    %267 = vmatprep.subr.mxu0 0.0
    %268 = vmatpush1.msra.mxu0 0.0
    %269 = vmatprep.subr.mxu0 0.0
    %270 = vmatpush1.msra.mxu0 0.0
    %271 = vmatprep.subr.mxu0 0.0
    %272 = vmatpush1.msra.mxu0 0.0
    %273 = vmatprep.subr.mxu0 0.0
    %274 = vmatpush1.msra.mxu0 0.0
    %275 = vmatprep.subr.mxu0 0.0
    %276 = vmatpush1.msra.mxu0 0.0
    %277 = vmatprep.subr.mxu0 0.0
    %278 = vmatpush1.msra.mxu0 0.0
    %279 = vmatprep.subr.mxu0 0.0
    %280 = vmatpush1.msra.mxu0 0.0
    %281 = vmatprep.subr.mxu0 0.0
    %282 = vmatpush1.msra.mxu0 0.0
    %283 = vmatprep.subr.mxu0 0.0
    %284 = vmatpush1.msra.mxu0 0.0
    %285 = vmatprep.subr.mxu0 0.0
    %286 = vmatpush1.msra.mxu0 0.0
    %287 = vmatprep.subr.mxu0 0.0
    %288 = vmatpush1.msra.mxu0 0.0
    %289 = vmatprep.subr.mxu0 0.0
    %290 = vmatpush1.msra.mxu0 0.0
    %291 = vmatprep.subr.mxu0 0.0
    %292 = vmatpush1.msra.mxu0 0.0
    %293 = vmatprep.subr.mxu0 0.0
    %294 = vmatpush1.msra.mxu0 0.0
    %295 = vmatprep.subr.mxu0 0.0
    %296 = vmatpush1.msra.mxu0 0.0
    %297 = vmatprep.subr.mxu0 0.0
    %298 = vmatpush1.msra.mxu0 0.0
    %299 = vmatprep.mubr.f32.mxu0 0.0
    %300 = vmatmul.mubr.f32.gmra.mrb[0].mxu0 %v230
    %v301 = vpop.f32.mrb[0].mxu0
    %v302 = vadd.f32 %v234, %v301
    %v303 = vpop.f32.mrb[0].mxu0
    %304 = vdwg.mxu0
    %vm305 = vcmask 31744
    %306 = vst.msk [vmem:[%s3] sm:$0xff] %vm305, %v302
    // Predicated region
    $region22: #{tpu_custom_call.1} parent=1 // pred_check
      _
    $region23: #{tpu_custom_call.1} parent=1 // pred_check_branch
      %308 = sbr.rel (0) target = $region25
    $region24: #{tpu_custom_call.1} parent=1 // pred_region
      _
    $region25: #{tpu_custom_call.1} parent=1 // pred_fallthru
      _
    // Predicated region
    $region26: #{tpu_custom_call.1} parent=1 // pred_check
      _
    $region27: #{tpu_custom_call.1} parent=1 // pred_check_branch
      %310 = sbr.rel (0) target = $region29
    $region28: #{tpu_custom_call.1} parent=1 // pred_region
      _
    $region29: #{tpu_custom_call.1} parent=1 // pred_fallthru
      _
    %311 = vsyncpa [#allocation3], 1
    %312 = vsyncpa [#allocation5], 1

</llo_original>
